<compile_context>
chip_gen: v5e
topology: v5e:2x2
jax: 0.10.0
libtpu: 0.0.40
codegen_flags: <defaults>
</compile_context>

<pallas_src>
import jax
import jax.numpy as jnp
from jax import lax
from jax.experimental import pallas as pl
from jax.experimental.pallas import tpu as pltpu

EPS = 1e-5


def _batchnorm1d_kernel(x_ref, gamma_ref, beta_ref, o_ref):
    # One (N, TILE_D) feature-slab per grid step; axis-0 (batch) reduction is
    # fully block-resident, so D-tiles are independent.
    x = x_ref[...].astype(jnp.float32)
    mean = jnp.mean(x, axis=0, keepdims=True)                    # (1, TILE_D)
    centered = x - mean
    var = jnp.mean(centered * centered, axis=0, keepdims=True)   # biased var
    inv_std = lax.rsqrt(var + EPS)
    # Fuse normalization + affine into one per-element mul+add:
    #   y = (x - mean) * inv_std * gamma + beta = x * scale + shift
    scale = inv_std * gamma_ref[...]                             # (1, TILE_D)
    shift = beta_ref[...] - mean * scale                         # (1, TILE_D)
    o_ref[...] = (x * scale + shift).astype(o_ref.dtype)


def _pick_tile_d(D, max_tile_d):
    # Largest multiple of 128 that divides D and is <= max_tile_d.  Fall back
    # to the full D when it is not lane-aligned (block == array dim is legal).
    if D % 128 != 0:
        return D
    td = 128
    while td * 2 <= min(max_tile_d, D) and D % (td * 2) == 0:
        td *= 2
    return td


def normalize_batch(x, gamma, beta, *, max_tile_d=512):
    """Training-mode BatchNorm1d via Pallas.

    x:     (N, D)   input
    gamma: (D,)     affine weight
    beta:  (D,)     affine bias
    """
    N, D = x.shape
    tile_d = _pick_tile_d(D, max_tile_d)
    grid = (D // tile_d,)

    gamma2 = gamma.reshape(1, D).astype(jnp.float32)
    beta2 = beta.reshape(1, D).astype(jnp.float32)

    cost = pl.CostEstimate(
        flops=5 * N * D,
        transcendentals=D,  # one rsqrt per feature
        bytes_accessed=2 * N * D * x.dtype.itemsize + 2 * D * 4,
    )

    return pl.pallas_call(
        _batchnorm1d_kernel,
        out_shape=jax.ShapeDtypeStruct((N, D), x.dtype),
        grid=grid,
        in_specs=[
            pl.BlockSpec((N, tile_d), lambda j: (0, j)),
            pl.BlockSpec((1, tile_d), lambda j: (0, j)),
            pl.BlockSpec((1, tile_d), lambda j: (0, j)),
        ],
        out_specs=pl.BlockSpec((N, tile_d), lambda j: (0, j)),
        compiler_params=pltpu.CompilerParams(
            dimension_semantics=("parallel",),
        ),
        cost_estimate=cost,
    )(x, gamma2, beta2)


def normalize_ref(x, gamma, beta):
    # Pure-JAX reference of torch.nn.BatchNorm1d (training mode).
    x32 = x.astype(jnp.float32)
    mean = jnp.mean(x32, axis=0, keepdims=True)
    var = jnp.mean((x32 - mean) ** 2, axis=0, keepdims=True)
    return ((x32 - mean) / jnp.sqrt(var + EPS)) * gamma[None, :] + beta[None, :]


if __name__ == "__main__":
    key = jax.random.PRNGKey(0)
    kx, kg, kb, kx2 = jax.random.split(key, 4)

    # Case 1: lane-aligned D — exercises the D-tiled grid (2 steps of 128 lanes).
    N, D = 8, 256
    x = jax.random.normal(kx, (N, D), dtype=jnp.float32)
    gamma = 1.0 + 0.1 * jax.random.normal(kg, (D,), dtype=jnp.float32)
    beta = 0.1 * jax.random.normal(kb, (D,), dtype=jnp.float32)

    out = jax.block_until_ready(normalize_batch(x, gamma, beta, max_tile_d=128))
    ref = normalize_ref(x, gamma, beta)
    assert jnp.allclose(out, ref, atol=1e-5, rtol=1e-5), "mismatch (tiled case)"

    # Case 2: small unaligned hidden dim (like the PyGCL example) — whole-D block.
    N2, D2 = 8, 32
    x2 = jax.random.normal(kx2, (N2, D2), dtype=jnp.float32)
    gamma2 = jnp.ones((D2,), dtype=jnp.float32)   # BatchNorm1d default weight
    beta2 = jnp.zeros((D2,), dtype=jnp.float32)   # BatchNorm1d default bias
    out2 = jax.block_until_ready(normalize_batch(x2, gamma2, beta2))
    ref2 = normalize_ref(x2, gamma2, beta2)
    assert jnp.allclose(out2, ref2, atol=1e-5, rtol=1e-5), "mismatch (small case)"

    print("KERNEL_OK")
</pallas_src>

<mosaic_0001>
module attributes {stable_mosaic.version = 11 : i64} {
  func.func @_batchnorm1d_kernel(%arg0: i32, %arg1: memref<8x128xf32, #tpu.memory_space<vmem>>, %arg2: memref<1x128xf32, #tpu.memory_space<vmem>>, %arg3: memref<1x128xf32, #tpu.memory_space<vmem>>, %arg4: memref<8x128xf32, #tpu.memory_space<vmem>>) attributes {dimension_semantics = [#tpu.dimension_semantics<parallel>], iteration_bounds = array<i64: 2>, scalar_prefetch = 0 : i64, scratch_operands = 0 : i64, tpu.core_type = #tpu.core_type<tc>, window_params = [{transform_indices = @transform_0, window_bounds = array<i64: 8, 128>}, {transform_indices = @transform_1, window_bounds = array<i64: 1, 128>}, {transform_indices = @transform_2, window_bounds = array<i64: 1, 128>}, {transform_indices = @transform_3, window_bounds = array<i64: 8, 128>}]} {
    %c0 = arith.constant 0 : index
    %c0_0 = arith.constant 0 : index
    %0 = vector.load %arg1[%c0, %c0_0] : memref<8x128xf32, #tpu.memory_space<vmem>>, vector<8x128xf32>
    %cst = arith.constant dense<0.000000e+00> : vector<128xf32>
    %1 = vector.multi_reduction <add>, %0, %cst [0] : vector<8x128xf32> to vector<128xf32>
    %2 = vector.shape_cast %1 : vector<128xf32> to vector<1x128xf32>
    %cst_1 = arith.constant 8.000000e+00 : f32
    %3 = vector.broadcast %cst_1 : f32 to vector<1x128xf32>
    %4 = arith.divf %2, %3 : vector<1x128xf32>
    %5 = vector.broadcast %4 : vector<1x128xf32> to vector<8x128xf32>
    %6 = arith.subf %0, %5 : vector<8x128xf32>
    %7 = arith.mulf %6, %6 : vector<8x128xf32>
    %cst_2 = arith.constant dense<0.000000e+00> : vector<128xf32>
    %8 = vector.multi_reduction <add>, %7, %cst_2 [0] : vector<8x128xf32> to vector<128xf32>
    %9 = vector.shape_cast %8 : vector<128xf32> to vector<1x128xf32>
    %cst_3 = arith.constant 8.000000e+00 : f32
    %10 = vector.broadcast %cst_3 : f32 to vector<1x128xf32>
    %11 = arith.divf %9, %10 : vector<1x128xf32>
    %cst_4 = arith.constant 9.99999974E-6 : f32
    %12 = vector.broadcast %cst_4 : f32 to vector<1x128xf32>
    %13 = arith.addf %11, %12 : vector<1x128xf32>
    %14 = math.rsqrt %13 : vector<1x128xf32>
    %c0_5 = arith.constant 0 : index
    %c0_6 = arith.constant 0 : index
    %15 = vector.load %arg2[%c0_5, %c0_6] : memref<1x128xf32, #tpu.memory_space<vmem>>, vector<1x128xf32>
    %16 = arith.mulf %14, %15 : vector<1x128xf32>
    %c0_7 = arith.constant 0 : index
    %c0_8 = arith.constant 0 : index
    %17 = vector.load %arg3[%c0_7, %c0_8] : memref<1x128xf32, #tpu.memory_space<vmem>>, vector<1x128xf32>
    %18 = arith.mulf %4, %16 : vector<1x128xf32>
    %19 = arith.subf %17, %18 : vector<1x128xf32>
    %20 = vector.broadcast %16 : vector<1x128xf32> to vector<8x128xf32>
    %21 = arith.mulf %0, %20 : vector<8x128xf32>
    %22 = vector.broadcast %19 : vector<1x128xf32> to vector<8x128xf32>
    %23 = arith.addf %21, %22 : vector<8x128xf32>
    %c0_9 = arith.constant 0 : index
    %c0_10 = arith.constant 0 : index
    %24 = vector.load %arg4[%c0_9, %c0_10] : memref<8x128xf32, #tpu.memory_space<vmem>>, vector<8x128xf32>
    tpu.vector_store %arg4[%c0_9, %c0_10], %23 {strides = array<i32>} : memref<8x128xf32, #tpu.memory_space<vmem>>, vector<8x128xf32>,
    return
  }
  func.func @transform_0(%arg0: i32) -> (i32, i32) {
    %c0_i32 = arith.constant 0 : i32
    %c0_i32_0 = arith.constant 0 : i32
    return %c0_i32, %arg0 : i32, i32
  }
  func.func @transform_1(%arg0: i32) -> (i32, i32) {
    %c0_i32 = arith.constant 0 : i32
    %c0_i32_0 = arith.constant 0 : i32
    return %c0_i32, %arg0 : i32, i32
  }
  func.func @transform_2(%arg0: i32) -> (i32, i32) {
    %c0_i32 = arith.constant 0 : i32
    %c0_i32_0 = arith.constant 0 : i32
    return %c0_i32, %arg0 : i32, i32
  }
  func.func @transform_3(%arg0: i32) -> (i32, i32) {
    %c0_i32 = arith.constant 0 : i32
    %c0_i32_0 = arith.constant 0 : i32
    return %c0_i32, %arg0 : i32, i32
  }
}

</mosaic_0001>

<llo_original>
// kernel: tpu_custom_call.1
$region0: #{tpu_custom_call.1}
  #allocation0 [shape = 'u32[]', space=smem, size = 0x4, offset = 0x4, fixed_abs, tag = 'smem constant byte address 0x4 - core index']
  #allocation1 [shape = 'u32[72,128]{1,0:T(1,128)}', space=vmem, size = 0x9000, scoped, tag = 'internal scratch']
  %s0 = inlined_call_operand.hbm [shape: f32[8,256], index: 0, kind: input, shape index: {}]
  %s1 = inlined_call_operand.hbm [shape: f32[1,256], index: 1, kind: input, shape index: {}]
  %s2 = inlined_call_operand.hbm [shape: f32[1,256], index: 2, kind: input, shape index: {}]
  %s3 = inlined_call_operand.hbm [shape: f32[8,256], index: 3, kind: output, shape index: {}]
  %s4 = sld [smem:[#allocation0]]
  $region57: #{tpu_custom_call.1} parent=0
    _
  %s6 = ssub.s32 1, %s4
  %s7 = scalar_select 0, %s6, %s4
  $region1: #{tpu_custom_call.1} parent=0
    #allocation2 [shape = 'u8[8192]{0}', space=vmem, size = 0x2000, scoped, tag = 'input window, operand 0']
    #allocation3 [shape = 's32[2]{0}', space=sflag, size = 0x8, scoped, tag = 'scoped memory for tpu_custom_call.1']
    #allocation4 [shape = 's32[2]{0}', space=sflag, size = 0x8, scoped, tag = 'scoped memory for tpu_custom_call.1']
    #allocation5 [shape = 'u8[1024]{0}', space=vmem, size = 0x400, scoped, tag = 'input window, operand 1']
    #allocation6 [shape = 's32[2]{0}', space=sflag, size = 0x8, scoped, tag = 'scoped memory for tpu_custom_call.1']
    #allocation7 [shape = 'u8[1024]{0}', space=vmem, size = 0x400, scoped, tag = 'input window, operand 2']
    #allocation8 [shape = 'u8[8192]{0}', space=vmem, size = 0x2000, scoped, tag = 'output window, operand 0']
    %8 = vsyncpa [#allocation3], 0
    %s9 = scalar_lea.sflag [#allocation3], 1
    %10 = vsyncpa %s9, 0
    %11 = vsyncpa [#allocation6], 0
    %s12 = scalar_lea.sflag [#allocation6], 1
    %13 = vsyncpa %s12, 0
    %14 = vsyncpa [#allocation4], 0
    %s15 = scalar_lea.sflag [#allocation4], 1
    %16 = vsyncpa %s15, 0
    loop: start=0, step=1, limit=4
    $region2: #{tpu_custom_call.1} parent=1 // loop_pre_header
      _
    $region3: #{tpu_custom_call.1} parent=1 // loop_header
      %s18 = sphi 0, %s22
      %p19 = scmp.ge.s32.totalorder %s18, 4
      %s28 = sphi 0, %s30
      %s31 = sphi 0, %s28
      %s32 = sphi 0, %s31
      %s48 = sphi 0, %s32
      %s54 = sphi 0, %s56
      %s57 = sphi 0, %s54
      %s58 = sphi 0, %s57
      %s74 = sphi 0, %s58
      %s80 = sphi 0, %s82
      %s83 = sphi 0, %s80
      %s84 = sphi 0, %s83
      %s100 = sphi 0, %s84
      %s106 = sphi 0, %s108
      %s109 = sphi 0, %s106
      %s110 = sphi 0, %s109
      %s126 = sphi 0, %s110
    $region4: #{tpu_custom_call.1} parent=1 // loop_header_branch
      %21 = sbr.rel (%p19) target = $region8
    $region5: #{tpu_custom_call.1} parent=1 // loop_body
      %s23 = ssub.s32 %s18, 1
      %s24 = ssub.s32 %s18, 2
      %s25 = sadd.s32 %s18, 1
      %s26 = ssub.s32 %s18, %s25
      %p27 = scmp.eq.s32.totalorder %s26, 0
      %s29 = sadd.s32 %s28, 1
      %s30 = scalar_select %p27, %s28, %s29
      %p33 = pneg %p27
      %p34 = scmp.eq.s32.totalorder %s18, 1
      %p35 = por %p33, %p34
      %p36 = scmp.ne.s32.totalorder %s28, %s31
      %p37 = scmp.eq.s32.totalorder %s18, 0
      %p38 = por %p36, %p37
      %p39 = scmp.ne.s32.totalorder %s28, %s31
      %p40 = scmp.eq.s32.totalorder %s23, 1
      %p41 = por %p39, %p40
      %p42 = scmp.ne.s32.totalorder %s31, %s32
      %p43 = scmp.eq.s32.totalorder %s23, 0
      %p44 = por %p42, %p43
      %p45 = scmp.ne.s32.totalorder %s31, %s32
      %p46 = scmp.eq.s32.totalorder %s24, 1
      %p47 = por %p45, %p46
      %p49 = scmp.ne.s32.totalorder %s32, %s48
      %p50 = scmp.eq.s32.totalorder %s24, 0
      %p51 = por %p49, %p50
      %s52 = ssub.s32 %s18, %s25
      %p53 = scmp.eq.s32.totalorder %s52, 0
      %s55 = sadd.s32 %s54, 1
      %s56 = scalar_select %p53, %s54, %s55
      %p59 = pneg %p53
      %p60 = scmp.eq.s32.totalorder %s18, 1
      %p61 = por %p59, %p60
      %p62 = scmp.ne.s32.totalorder %s54, %s57
      %p63 = scmp.eq.s32.totalorder %s18, 0
      %p64 = por %p62, %p63
      %p65 = scmp.ne.s32.totalorder %s54, %s57
      %p66 = scmp.eq.s32.totalorder %s23, 1
      %p67 = por %p65, %p66
      %p68 = scmp.ne.s32.totalorder %s57, %s58
      %p69 = scmp.eq.s32.totalorder %s23, 0
      %p70 = por %p68, %p69
      %p71 = scmp.ne.s32.totalorder %s57, %s58
      %p72 = scmp.eq.s32.totalorder %s24, 1
      %p73 = por %p71, %p72
      %p75 = scmp.ne.s32.totalorder %s58, %s74
      %p76 = scmp.eq.s32.totalorder %s24, 0
      %p77 = por %p75, %p76
      %s78 = ssub.s32 %s18, %s25
      %p79 = scmp.eq.s32.totalorder %s78, 0
      %s81 = sadd.s32 %s80, 1
      %s82 = scalar_select %p79, %s80, %s81
      %p85 = pneg %p79
      %p86 = scmp.eq.s32.totalorder %s18, 1
      %p87 = por %p85, %p86
      %p88 = scmp.ne.s32.totalorder %s80, %s83
      %p89 = scmp.eq.s32.totalorder %s18, 0
      %p90 = por %p88, %p89
      %p91 = scmp.ne.s32.totalorder %s80, %s83
      %p92 = scmp.eq.s32.totalorder %s23, 1
      %p93 = por %p91, %p92
      %p94 = scmp.ne.s32.totalorder %s83, %s84
      %p95 = scmp.eq.s32.totalorder %s23, 0
      %p96 = por %p94, %p95
      %p97 = scmp.ne.s32.totalorder %s83, %s84
      %p98 = scmp.eq.s32.totalorder %s24, 1
      %p99 = por %p97, %p98
      %p101 = scmp.ne.s32.totalorder %s84, %s100
      %p102 = scmp.eq.s32.totalorder %s24, 0
      %p103 = por %p101, %p102
      %s104 = ssub.s32 %s18, %s25
      %p105 = scmp.eq.s32.totalorder %s104, 0
      %s107 = sadd.s32 %s106, 1
      %s108 = scalar_select %p105, %s106, %s107
      %p111 = pneg %p105
      %p112 = scmp.eq.s32.totalorder %s18, 1
      %p113 = por %p111, %p112
      %p114 = scmp.ne.s32.totalorder %s106, %s109
      %p115 = scmp.eq.s32.totalorder %s18, 0
      %p116 = por %p114, %p115
      %p117 = scmp.ne.s32.totalorder %s106, %s109
      %p118 = scmp.eq.s32.totalorder %s23, 1
      %p119 = por %p117, %p118
      %p120 = scmp.ne.s32.totalorder %s109, %s110
      %p121 = scmp.eq.s32.totalorder %s23, 0
      %p122 = por %p120, %p121
      %p123 = scmp.ne.s32.totalorder %s109, %s110
      %p124 = scmp.eq.s32.totalorder %s24, 1
      %p125 = por %p123, %p124
      %p127 = scmp.ne.s32.totalorder %s110, %s126
      %p128 = scmp.eq.s32.totalorder %s24, 0
      %p129 = por %p127, %p128
      %p130 = scmp.le.s32.totalorder 1, %s18
      %p131 = scmp.lt.s32.totalorder %s18, 3
      %p132 = pnand %p130, %p131
      %p133 = pneg %p132
      // Predicated region
      $region9: #{tpu_custom_call.1} parent=5 // pred_check
        _
      $region10: #{tpu_custom_call.1} parent=5 // pred_check_branch
        %135 = sbr.rel (%p132) target = $region12
      $region11: #{tpu_custom_call.1} parent=5 // pred_region
        %s136 = ssub.s32 %s18, 1
      $region12: #{tpu_custom_call.1} parent=5 // pred_fallthru
        _
      %p137 = scmp.lt.s32.totalorder %s18, 2
      // Predicated region
      $region13: #{tpu_custom_call.1} parent=5 // pred_check
        %p138 = pneg %p137
      $region14: #{tpu_custom_call.1} parent=5 // pred_check_branch
        %140 = sbr.rel (%p138) target = $region16
      $region15: #{tpu_custom_call.1} parent=5 // pred_region
        // Predicated region
        $region17: #{tpu_custom_call.1} parent=15 // pred_check
          %p141 = pneg %p38
        $region18: #{tpu_custom_call.1} parent=15 // pred_check_branch
          %143 = sbr.rel (%p141) target = $region20
        $region19: #{tpu_custom_call.1} parent=15 // pred_region
          %s144 = sand.u32 %s28, 1
          %s145 = scalar_lea.sflag [#allocation3], %s144
          %s146 = sand.u32 %s28, 1
          %s147 = smul.addr %s146, 8
          %s148 = scalar_lea.vmem [#allocation2], %s147
          %150 = vsyncadd %s145, 0
          %s151 = smul.addr %s18, 8
          %s152 = scalar_lea.hbm %s0, %s151
          %s154 = sshll.u32 %s152, 4
          %s155 = int_to_ptr.hbm [resolvable:$true] %s154
          %s156 = sshll.u32 %s148, 4
          %s157 = int_to_ptr.vmem [resolvable:$true] %s156
          %159 = dma.hbm_to_vmem [thread:$0]  %s155, 128, %s157, %s145
        $region20: #{tpu_custom_call.1} parent=15 // pred_fallthru
          _
        // Predicated region
        $region21: #{tpu_custom_call.1} parent=15 // pred_check
          %p160 = pneg %p64
        $region22: #{tpu_custom_call.1} parent=15 // pred_check_branch
          %162 = sbr.rel (%p160) target = $region24
        $region23: #{tpu_custom_call.1} parent=15 // pred_region
          %s163 = sand.u32 %s18, 1
          %s164 = scalar_lea.sflag [#allocation6], %s163
          %s165 = sand.u32 %s54, 1
          %s166 = scalar_lea.vmem [#allocation5], %s165
          %168 = vsyncadd %s164, 0
          %s169 = scalar_lea.hbm %s1, %s18
          %s171 = sshll.u32 %s169, 4
          %s172 = int_to_ptr.hbm [resolvable:$true] %s171
          %s173 = sshll.u32 %s166, 4
          %s174 = int_to_ptr.vmem [resolvable:$true] %s173
          %176 = dma.hbm_to_vmem [thread:$0]  %s172, 16, %s174, %s164
        $region24: #{tpu_custom_call.1} parent=15 // pred_fallthru
          _
        // Predicated region
        $region25: #{tpu_custom_call.1} parent=15 // pred_check
          %p177 = pneg %p90
        $region26: #{tpu_custom_call.1} parent=15 // pred_check_branch
          %179 = sbr.rel (%p177) target = $region28
        $region27: #{tpu_custom_call.1} parent=15 // pred_region
          %s180 = sand.u32 %s18, 1
          %s181 = scalar_lea.sflag [#allocation6], %s180
          %s182 = sand.u32 %s80, 1
          %s183 = scalar_lea.vmem [#allocation7], %s182
          %185 = vsyncadd %s181, 0
          %s186 = scalar_lea.hbm %s2, %s18
          %s188 = sshll.u32 %s186, 4
          %s189 = int_to_ptr.hbm [resolvable:$true] %s188
          %s190 = sshll.u32 %s183, 4
          %s191 = int_to_ptr.vmem [resolvable:$true] %s190
          %193 = dma.hbm_to_vmem [thread:$0]  %s189, 16, %s191, %s181
        $region28: #{tpu_custom_call.1} parent=15 // pred_fallthru
          _
      $region16: #{tpu_custom_call.1} parent=5 // pred_fallthru
        _
      %p194 = scmp.le.s32.totalorder 1, %s18
      %p195 = scmp.lt.s32.totalorder %s18, 3
      %p196 = pnand %p194, %p195
      %p197 = pneg %p196
      // Predicated region
      $region29: #{tpu_custom_call.1} parent=5 // pred_check
        _
      $region30: #{tpu_custom_call.1} parent=5 // pred_check_branch
        %199 = sbr.rel (%p196) target = $region32
      $region31: #{tpu_custom_call.1} parent=5 // pred_region
        %s200 = ssub.s32 %s18, 1
        %s201 = sand.u32 %s31, 1
        %s202 = scalar_lea.sflag [#allocation3], %s201
        %s203 = sand.u32 %s31, 1
        %s204 = smul.addr %s203, 8
        %s205 = scalar_lea.vmem [#allocation2], %s204
        // Predicated region
        $region33: #{tpu_custom_call.1} parent=31 // pred_check
          %p206 = pneg %p44
        $region34: #{tpu_custom_call.1} parent=31 // pred_check_branch
          %208 = sbr.rel (%p206) target = $region36
        $region35: #{tpu_custom_call.1} parent=31 // pred_region
          %210 = dma.done %s202, 128
        $region36: #{tpu_custom_call.1} parent=31 // pred_fallthru
          _
        %s211 = sand.u32 %s23, 1
        %s212 = scalar_lea.sflag [#allocation6], %s211
        %s213 = sand.u32 %s57, 1
        %s214 = scalar_lea.vmem [#allocation5], %s213
        // Predicated region
        $region37: #{tpu_custom_call.1} parent=31 // pred_check
          %p215 = pneg %p70
        $region38: #{tpu_custom_call.1} parent=31 // pred_check_branch
          %217 = sbr.rel (%p215) target = $region40
        $region39: #{tpu_custom_call.1} parent=31 // pred_region
          %219 = dma.done %s212, 16
        $region40: #{tpu_custom_call.1} parent=31 // pred_fallthru
          _
        %s220 = sand.u32 %s23, 1
        %s221 = scalar_lea.sflag [#allocation6], %s220
        %s222 = sand.u32 %s83, 1
        %s223 = scalar_lea.vmem [#allocation7], %s222
        // Predicated region
        $region41: #{tpu_custom_call.1} parent=31 // pred_check
          %p224 = pneg %p96
        $region42: #{tpu_custom_call.1} parent=31 // pred_check_branch
          %226 = sbr.rel (%p224) target = $region44
        $region43: #{tpu_custom_call.1} parent=31 // pred_region
          %228 = dma.done %s221, 16
        $region44: #{tpu_custom_call.1} parent=31 // pred_fallthru
          _
        %s229 = sand.u32 %s31, 1
        %s230 = scalar_lea.sflag [#allocation3], %s229
        %s231 = sand.u32 %s31, 1
        %s232 = smul.addr %s231, 8
        %s233 = scalar_lea.vmem [#allocation2], %s232
        %p234 = pneg %p44
        %p235 = pneg %p41
        %s236 = sand.u32 %s23, 1
        %s237 = scalar_lea.sflag [#allocation6], %s236
        %s238 = sand.u32 %s57, 1
        %s239 = scalar_lea.vmem [#allocation5], %s238
        %p240 = pneg %p70
        %p241 = pneg %p67
        %s242 = sand.u32 %s23, 1
        %s243 = scalar_lea.sflag [#allocation6], %s242
        %s244 = sand.u32 %s83, 1
        %s245 = scalar_lea.vmem [#allocation7], %s244
        %p246 = pneg %p96
        %p247 = pneg %p93
        %p248 = pneg %p122
        %p249 = pneg %p119
        %s250 = sand.u32 %s109, 1
        %s251 = scalar_lea.sflag [#allocation4], %s250
        %s252 = sand.u32 %s109, 1
        %s253 = smul.addr %s252, 8
        %s254 = scalar_lea.vmem [#allocation8], %s253
        %v255 = vld [vmem:[%s205] sm:$0xff]
        %v256 = vrot.slane %v255, 4
        %v257 = vadd.f32 %v255, %v256
        %v258 = vrot.slane %v257, 2
        %v259 = vadd.f32 %v257, %v258
        %v260 = vrot.slane %v259, 1
        %v261 = vadd.f32 %v259, %v260
        %v262 = vrcp.pop 8.0
        %v263 = vmul.f32 8.0, %v262
        %v264 = vsub.f32 1.0, %v263
        %v265 = vmul.f32 %v262, %v264
        %v266 = vadd.f32 %v262, %v265
        %vm267 = vweird.f32 %v262
        %v268 = vsel %vm267, %v262, %v266
        %v269 = vmul.f32 %v261, %v268
        %v270 = vsub.f32 %v255, %v269
        %v271 = vmul.f32 %v270, %v270
        %v272 = vrot.slane %v271, 4
        %v273 = vadd.f32 %v271, %v272
        %v274 = vrot.slane %v273, 2
        %v275 = vadd.f32 %v273, %v274
        %v276 = vrot.slane %v275, 1
        %v277 = vadd.f32 %v275, %v276
        %v278 = vmul.f32 %v277, %v268
        %v279 = vadd.f32 %v278, 1e-05
        %v280 = vrsqrt.pop %v279
        %v281 = vmul.f32 %v280, %v279
        %v282 = vmul.f32 %v281, %v280
        %v283 = vmul.f32 0.5, %v282
        %v284 = vsub.f32 1.5, %v283
        %v285 = vmul.f32 %v280, %v284
        %vm286 = vweird.f32 %v279
        %vm287 = vweird.f32 %v280
        %vm288 = vmor %vm286, %vm287
        %v289 = vsel %vm288, %v280, %v285
        %v290 = vld [vmem:[%s214] sm:$0x1]
        %v291 = vmul.f32 %v289, %v290
        %v292 = vld [vmem:[%s223] sm:$0x1]
        %v293 = vmul.f32 %v269, %v291
        %v294 = vsub.f32 %v292, %v293
        %v295 = vperm.slane %v291, 0
        %v296 = vmul.f32 %v255, %v295
        %v298 = vperm.slane %v294, 0
        %v300 = vadd.f32 %v296, %v298
        %301 = vst [vmem:[%s254] sm:$0xff] %v300
        %s302 = sand.u32 %s109, 1
        %s303 = scalar_lea.sflag [#allocation4], %s302
        %s304 = sand.u32 %s109, 1
        %s305 = smul.addr %s304, 8
        %s306 = scalar_lea.vmem [#allocation8], %s305
        // Predicated region
        $region45: #{tpu_custom_call.1} parent=31 // pred_check
          %p307 = pneg %p119
        $region46: #{tpu_custom_call.1} parent=31 // pred_check_branch
          %309 = sbr.rel (%p307) target = $region48
        $region47: #{tpu_custom_call.1} parent=31 // pred_region
          %311 = vsyncadd %s303, 0
          %s312 = smul.addr %s23, 8
          %s313 = scalar_lea.hbm %s3, %s312
          %s315 = sshll.u32 %s306, 4
          %s316 = int_to_ptr.vmem [resolvable:$true] %s315
          %s317 = sshll.u32 %s313, 4
          %s318 = int_to_ptr.hbm [resolvable:$true] %s317
          %320 = dma.vmem_to_hbm [thread:$0]  %s316, 128, %s318, %s303
        $region48: #{tpu_custom_call.1} parent=31 // pred_fallthru
          _
      $region32: #{tpu_custom_call.1} parent=5 // pred_fallthru
        _
      %p321 = scmp.le.s32.totalorder 2, %s18
      // Predicated region
      $region49: #{tpu_custom_call.1} parent=5 // pred_check
        %p322 = pneg %p321
      $region50: #{tpu_custom_call.1} parent=5 // pred_check_branch
        %324 = sbr.rel (%p322) target = $region52
      $region51: #{tpu_custom_call.1} parent=5 // pred_region
        %s325 = ssub.s32 %s18, 2
        // Predicated region
        $region53: #{tpu_custom_call.1} parent=51 // pred_check
          %p326 = pneg %p125
        $region54: #{tpu_custom_call.1} parent=51 // pred_check_branch
          %328 = sbr.rel (%p326) target = $region56
        $region55: #{tpu_custom_call.1} parent=51 // pred_region
          %s329 = sand.u32 %s110, 1
          %s330 = scalar_lea.sflag [#allocation4], %s329
          %s331 = sand.u32 %s110, 1
          %s332 = smul.addr %s331, 8
          %s333 = scalar_lea.vmem [#allocation8], %s332
          %335 = dma.done %s330, 128
        $region56: #{tpu_custom_call.1} parent=51 // pred_fallthru
          _
      $region52: #{tpu_custom_call.1} parent=5 // pred_fallthru
        _
    $region6: #{tpu_custom_call.1} parent=1 // loop_footer
      %s22 = sadd.s32 1, %s18
    $region7: #{tpu_custom_call.1} parent=1 // loop_footer_branch
      %17 = sbr.rel target = $region3
    $region8: #{tpu_custom_call.1} parent=1 // loop_exit
      _
    %336 = vsyncpa [#allocation3], 1
    %s337 = scalar_lea.sflag [#allocation3], 1
    %338 = vsyncpa %s337, 1
    %339 = vsyncpa [#allocation6], 1
    %s340 = scalar_lea.sflag [#allocation6], 1
    %341 = vsyncpa %s340, 1
    %342 = vsyncpa [#allocation4], 1
    %s343 = scalar_lea.sflag [#allocation4], 1
    %344 = vsyncpa %s343, 1

</llo_original>
